<compile_context>
chip_gen: v7x
topology: tpu7x:2x2x1
jax: 0.10.0
libtpu: 0.0.40
codegen_flags: <defaults>
</compile_context>

<pallas_src>
import jax
import jax.numpy as jnp
from jax import lax
from jax.experimental import pallas as pl
from jax.experimental.pallas import tpu as pltpu


def _cconv2d_matmul_kernel(w_ref, b_ref, x_ref, o_ref):
    # One fat MXU matmul per grid step:
    #   (2*C_out, K) @ (K, tile_m) -> (2*C_out, tile_m)   lane-dense store.
    acc = jnp.dot(w_ref[...], x_ref[0], preferred_element_type=jnp.float32)
    o_ref[0] = acc + b_ref[...]          # f32 bias broadcast along the lane axis


def _choose_tile_m(n, m_img, requested):
    """Lane-dense (multiple-of-128) tile over the per-image pixel axis."""
    m128 = pl.cdiv(m_img, 128) * 128
    tile = max(128, min((requested // 128) * 128, m128))
    # Keep at least 2 grid steps so both v7x TensorCores get work
    # (v5e/v6e are single-TC; the extra step only costs ~0.35us there).
    if n * pl.cdiv(m_img, tile) < 2 and m128 >= 256:
        tile = max(128, pl.cdiv(pl.cdiv(m_img, 128), 2) * 128)
    return tile


def cconv2d(x_r, x_i, w_r, w_i, b_r, b_i, *, ks, pad, tile_m=2048,
            compute_dtype=jnp.bfloat16):
    """Complex conv2d (CConv2d forward).

    x_r, x_i : (N, C_in, H, W)        float32  (PyTorch NCHW)
    w_r, w_i : (C_out, C_in, ks, ks)  float32  (PyTorch OIHW)
    b_r, b_i : (C_out,)               float32
    returns  : (o_r, o_i), each (N, C_out, H_out, W_out), float32
    """
    N, C_in, H, W = x_r.shape
    C_out = w_r.shape[0]
    H_out = H + 2 * pad - ks + 1
    W_out = W + 2 * pad - ks + 1
    K = ks * ks * 2 * C_in
    M_img = H_out * W_out

    # ---- layout plumbing (plain JAX, outside the kernel) --------------------
    # Channel-pack real/imag, cast to the narrow compute dtype BEFORE the
    # ks*ks tap expansion, pad spatially.  N stays outermost, so the stacked
    # taps reshape contiguously to (N, K, M) -- no transpose of the expanded
    # tensor (or of the input) is ever materialized.
    x = jnp.concatenate([x_r, x_i], axis=1).astype(compute_dtype)   # (N, 2C_in, H, W)
    x = jnp.pad(x, ((0, 0), (0, 0), (pad, pad), (pad, pad)))
    taps = [x[:, :, dy:dy + H_out, dx:dx + W_out]                   # (N, 2C_in, Ho, Wo)
            for dy in range(ks) for dx in range(ks)]
    patches = jnp.stack(taps, axis=1).reshape(N, K, M_img)          # (N, K, M)
    # TODO(synk): fold the tap reduction into the kernel (manual DMA of a
    # padded row block + shifted in-VMEM slices) to avoid materializing the
    # ks*ks-expanded patches at all; the shifted windows are not expressible
    # as rectangular BlockSpec tiles at these lane-sparse spatial sizes.

    # Block weight [[wr, wi], [-wi, wr]] flattened to (2*C_out, K); the K
    # ordering (tap, [real chans | imag chans]) matches `patches`.
    wr_k = w_r.transpose(0, 2, 3, 1).reshape(C_out, ks * ks, C_in)
    wi_k = w_i.transpose(0, 2, 3, 1).reshape(C_out, ks * ks, C_in)
    w_blk = jnp.concatenate(
        [jnp.concatenate([wr_k, -wi_k], axis=2).reshape(C_out, K),
         jnp.concatenate([wi_k, wr_k], axis=2).reshape(C_out, K)],
        axis=0).astype(compute_dtype)                                # (2*C_out, K)

    bias = jnp.concatenate([b_r - b_i, b_r + b_i]).reshape(2 * C_out, 1)
    bias = bias.astype(jnp.float32)                                  # f32 epilogue

    # Lane-dense tiling of the per-image pixel axis.
    tile = _choose_tile_m(N, M_img, tile_m)
    m_pad = pl.cdiv(M_img, tile) * tile
    if m_pad != M_img:
        patches = jnp.pad(patches, ((0, 0), (0, 0), (0, m_pad - M_img)))

    out = pl.pallas_call(
        _cconv2d_matmul_kernel,
        out_shape=jax.ShapeDtypeStruct((N, 2 * C_out, m_pad), jnp.float32),
        grid_spec=pltpu.PrefetchScalarGridSpec(
            num_scalar_prefetch=0,
            grid=(N, m_pad // tile),
            in_specs=[
                pl.BlockSpec((2 * C_out, K), lambda n, m: (0, 0)),    # resident weight
                pl.BlockSpec((2 * C_out, 1), lambda n, m: (0, 0)),    # resident bias
                # NOTE: add pipeline_mode=pl.Buffered(3) here only if a trace
                # shows exposed DMA on this stream (costs one extra K*tile buf).
                pl.BlockSpec((1, K, tile), lambda n, m: (n, 0, m)),    # im2col patches
            ],
            out_specs=pl.BlockSpec((1, 2 * C_out, tile), lambda n, m: (n, 0, m)),
        ),
        compiler_params=pltpu.CompilerParams(
            dimension_semantics=("parallel", "parallel"),
            vmem_limit_bytes=32 * 1024 * 1024),
    )(w_blk, bias, patches)

    out = out[:, :, :M_img]                                          # drop lane padding
    o_r = out[:, :C_out].reshape(N, C_out, H_out, W_out)             # no transposes
    o_i = out[:, C_out:].reshape(N, C_out, H_out, W_out)
    return o_r, o_i


def _reference_cconv2d(x_r, x_i, w_r, w_i, b_r, b_i, *, pad):
    """Pure-JAX reference matching the PyTorch module (NCHW / OIHW)."""
    dn = lax.conv_dimension_numbers(x_r.shape, w_r.shape, ("NCHW", "OIHW", "NCHW"))
    conv = lambda x, w: lax.conv_general_dilated(
        x, w, window_strides=(1, 1), padding=[(pad, pad), (pad, pad)],
        dimension_numbers=dn)
    br = b_r[None, :, None, None]
    bi = b_i[None, :, None, None]
    x_rr = conv(x_r, w_r) + br
    x_ri = conv(x_r, w_i) + bi
    x_ir = conv(x_i, w_r) + br
    x_ii = conv(x_i, w_i) + bi
    return x_rr - x_ii, x_ri + x_ir


if __name__ == "__main__":
    # Small shapes consistent with the module: batch=2, C_in=4, C_out=8,
    # spatial 16x16, ks=3, pad=1 (nn.Conv2d(num_in, num_out, ks, padding=pad)).
    N, C_in, C_out, H, W, ks, pad = 2, 4, 8, 16, 16, 3, 1

    key = jax.random.PRNGKey(0)
    k1, k2, k3, k4, k5, k6 = jax.random.split(key, 6)
    x_r = jax.random.normal(k1, (N, C_in, H, W), jnp.float32)
    x_i = jax.random.normal(k2, (N, C_in, H, W), jnp.float32)
    w_r = jax.random.normal(k3, (C_out, C_in, ks, ks), jnp.float32) * 0.1
    w_i = jax.random.normal(k4, (C_out, C_in, ks, ks), jnp.float32) * 0.1
    b_r = jax.random.normal(k5, (C_out,), jnp.float32) * 0.1
    b_i = jax.random.normal(k6, (C_out,), jnp.float32) * 0.1

    ref_r, ref_i = _reference_cconv2d(x_r, x_i, w_r, w_i, b_r, b_i, pad=pad)

    # f32 path: validates the complex-block packing / layout tightly.
    o_r32, o_i32 = cconv2d(x_r, x_i, w_r, w_i, b_r, b_i, ks=ks, pad=pad,
                           compute_dtype=jnp.float32)
    jax.block_until_ready((o_r32, o_i32))
    assert o_r32.shape == ref_r.shape and o_i32.shape == ref_i.shape
    assert jnp.allclose(o_r32, ref_r, atol=1e-3, rtol=1e-3)
    assert jnp.allclose(o_i32, ref_i, atol=1e-3, rtol=1e-3)

    # Default bf16 path (f32 accumulation) -- the perf-tuned configuration.
    o_r, o_i = cconv2d(x_r, x_i, w_r, w_i, b_r, b_i, ks=ks, pad=pad)
    jax.block_until_ready((o_r, o_i))
    assert o_r.shape == ref_r.shape and o_i.shape == ref_i.shape
    assert jnp.allclose(o_r, ref_r, atol=3e-2, rtol=3e-2)
    assert jnp.allclose(o_i, ref_i, atol=3e-2, rtol=3e-2)

    print("KERNEL_OK")
</pallas_src>

<mosaic_0001>
module attributes {stable_mosaic.version = 11 : i64} {
  func.func @_cconv2d_matmul_kernel(%arg0: i32, %arg1: i32, %arg2: memref<16x72xf32, #tpu.memory_space<vmem>>, %arg3: memref<16x1xf32, #tpu.memory_space<vmem>>, %arg4: memref<1x72x256xf32, #tpu.memory_space<vmem>>, %arg5: memref<1x16x256xf32, #tpu.memory_space<vmem>>) attributes {dimension_semantics = [#tpu.dimension_semantics<parallel>, #tpu.dimension_semantics<parallel>], iteration_bounds = array<i64: 2, 1>, scalar_prefetch = 0 : i64, scratch_operands = 0 : i64, tpu.core_type = #tpu.core_type<tc>, window_params = [{pipeline_mode = #tpu.pipeline_mode<synchronous>, transform_indices = @transform_0, window_bounds = array<i64: 16, 72>}, {pipeline_mode = #tpu.pipeline_mode<synchronous>, transform_indices = @transform_1, window_bounds = array<i64: 16, 1>}, {transform_indices = @transform_2, window_bounds = array<i64: 1, 72, 256>}, {transform_indices = @transform_3, window_bounds = array<i64: 1, 16, 256>}]} {
    %c0 = arith.constant 0 : index
    %c0_0 = arith.constant 0 : index
    %0 = vector.load %arg2[%c0, %c0_0] : memref<16x72xf32, #tpu.memory_space<vmem>>, vector<16x72xf32>
    %c0_1 = arith.constant 0 : index
    %c0_2 = arith.constant 0 : index
    %c0_3 = arith.constant 0 : index
    %1 = vector.load %arg4[%c0_1, %c0_2, %c0_3] : memref<1x72x256xf32, #tpu.memory_space<vmem>>, vector<1x72x256xf32>
    %2 = vector.shape_cast %1 : vector<1x72x256xf32> to vector<72x256xf32>
    %cst = arith.constant dense<0.000000e+00> : vector<16x256xf32>
    %3 = tpu.matmul %0, %2, %cst {dimension_numbers = #tpu.dot_dimension_numbers<[1], [0], [0], [1], [0, 0, 1, 1], [], []>} : vector<16x72xf32>, vector<72x256xf32>, vector<16x256xf32> -> vector<16x256xf32>
    %c0_4 = arith.constant 0 : index
    %c0_5 = arith.constant 0 : index
    %4 = vector.load %arg3[%c0_4, %c0_5] : memref<16x1xf32, #tpu.memory_space<vmem>>, vector<16x1xf32>
    %5 = vector.broadcast %4 : vector<16x1xf32> to vector<16x256xf32>
    %6 = arith.addf %3, %5 : vector<16x256xf32>
    %c0_6 = arith.constant 0 : index
    %c0_7 = arith.constant 0 : index
    %c0_8 = arith.constant 0 : index
    %7 = vector.load %arg5[%c0_6, %c0_7, %c0_8] : memref<1x16x256xf32, #tpu.memory_space<vmem>>, vector<1x16x256xf32>
    %8 = vector.shape_cast %7 : vector<1x16x256xf32> to vector<16x256xf32>
    %9 = vector.shape_cast %6 : vector<16x256xf32> to vector<1x16x256xf32>
    tpu.vector_store %arg5[%c0_6, %c0_7, %c0_8], %9 {strides = array<i32>} : memref<1x16x256xf32, #tpu.memory_space<vmem>>, vector<1x16x256xf32>,
    return
  }
  func.func @transform_0(%arg0: i32, %arg1: i32) -> (i32, i32) {
    %c0_i32 = arith.constant 0 : i32
    %c0_i32_0 = arith.constant 0 : i32
    %c0_i32_1 = arith.constant 0 : i32
    return %c0_i32, %c0_i32_0 : i32, i32
  }
  func.func @transform_1(%arg0: i32, %arg1: i32) -> (i32, i32) {
    %c0_i32 = arith.constant 0 : i32
    %c0_i32_0 = arith.constant 0 : i32
    %c0_i32_1 = arith.constant 0 : i32
    return %c0_i32, %c0_i32_0 : i32, i32
  }
  func.func @transform_2(%arg0: i32, %arg1: i32) -> (i32, i32, i32) {
    %c0_i32 = arith.constant 0 : i32
    %c0_i32_0 = arith.constant 0 : i32
    return %arg0, %c0_i32, %arg1 : i32, i32, i32
  }
  func.func @transform_3(%arg0: i32, %arg1: i32) -> (i32, i32, i32) {
    %c0_i32 = arith.constant 0 : i32
    %c0_i32_0 = arith.constant 0 : i32
    return %arg0, %c0_i32, %arg1 : i32, i32, i32
  }
}

</mosaic_0001>

<llo_original>
// kernel: tpu_custom_call.1
$region0: #{tpu_custom_call.1}
  #allocation0 [shape = 'u32[]', space=smem, size = 0x4, offset = 0x4, fixed_abs, tag = 'smem constant byte address 0x4 - core index']
  #allocation1 [shape = 'u32[144,128]{1,0:T(1,128)}', space=vmem, size = 0x12000, scoped, tag = 'internal scratch']
  %s0 = inlined_call_operand.vmem [shape: f32[16,72], index: 0, kind: input, shape index: {}]
  %s1 = inlined_call_operand.vmem [shape: f32[16,1], index: 1, kind: input, shape index: {}]
  %s2 = inlined_call_operand.hbm [shape: f32[2,72,256], index: 2, kind: input, shape index: {}]
  %s3 = inlined_call_operand.hbm [shape: f32[2,16,256], index: 3, kind: output, shape index: {}]
  %s4 = sld [smem:[#allocation0]]
  $region49: #{tpu_custom_call.1} parent=0
    _
  %s6 = ssub.s32 1, %s4
  %s7 = scalar_select 0, %s6, %s4
  $region1: #{tpu_custom_call.1} parent=0
    #allocation2 [shape = 'u8[147456]{0}', space=vmem, size = 0x24000, scoped, tag = 'input window, operand 2']
    #allocation3 [shape = 's32[2]{0}', space=sflag, size = 0x8, scoped, tag = 'scoped memory for tpu_custom_call.1']
    #allocation4 [shape = 's32[2]{0}', space=sflag, size = 0x8, scoped, tag = 'scoped memory for tpu_custom_call.1']
    #allocation5 [shape = 'u8[32768]{0}', space=vmem, size = 0x8000, scoped, tag = 'output window, operand 0']
    %8 = vsyncpa [#allocation3], 0
    %s9 = scalar_lea.sflag [#allocation3], 1
    %10 = vsyncpa %s9, 0
    %11 = vsyncpa [#allocation4], 0
    %s12 = scalar_lea.sflag [#allocation4], 1
    %13 = vsyncpa %s12, 0
    loop: start=0, step=1, limit=4
    $region2: #{tpu_custom_call.1} parent=1 // loop_pre_header
      _
    $region3: #{tpu_custom_call.1} parent=1 // loop_header
      %s15 = sphi 0, %s19
      %p16 = scmp.ge.s32.totalorder %s15, 4
      %s22 = sphi 0, %s34
      %s23 = sphi 0, %s30
      %s24 = sphi 0, %s22
      %s25 = sphi 0, %s23
      %s26 = sphi 0, %s24
      %s27 = sphi 0, %s25
      %s35 = sphi 0, %s35
      %s37 = sphi 0, %s35
      %s38 = sphi 0, %s37
      %s52 = sphi 0, %s38
      %s56 = sphi 0, %s56
      %s58 = sphi 0, %s56
      %s59 = sphi 0, %s58
      %s73 = sphi 0, %s59
      %s81 = sphi 0, %s83
      %s84 = sphi 0, %s81
      %s85 = sphi 0, %s84
      %s101 = sphi 0, %s85
      %s109 = sphi 0, %s111
      %s112 = sphi 0, %s109
      %s113 = sphi 0, %s112
      %s129 = sphi 0, %s113
    $region4: #{tpu_custom_call.1} parent=1 // loop_header_branch
      %18 = sbr.rel (%p16) target = $region8
    $region5: #{tpu_custom_call.1} parent=1 // loop_body
      %s20 = ssub.s32 %s15, 1
      %s21 = ssub.s32 %s15, 2
      %s28 = sadd.s32 1, %s23
      %p29 = scmp.ge.s32.totalorder %s28, 1
      %s30 = scalar_select %p29, 0, %s28
      %s31 = sadd.s32 1, %s22
      %s32 = scalar_select %p29, %s31, %s22
      %p33 = scmp.ge.s32.totalorder %s32, 2
      %s34 = scalar_select %p33, 0, %s32
      %s36 = sadd.s32 %s35, 1
      %p39 = scmp.eq.s32.totalorder %s15, 1
      %p40 = scmp.ne.s32.totalorder %s35, %s37
      %p41 = scmp.eq.s32.totalorder %s15, 0
      %p42 = por %p40, %p41
      %p43 = scmp.ne.s32.totalorder %s35, %s37
      %p44 = scmp.eq.s32.totalorder %s20, 1
      %p45 = por %p43, %p44
      %p46 = scmp.ne.s32.totalorder %s37, %s38
      %p47 = scmp.eq.s32.totalorder %s20, 0
      %p48 = por %p46, %p47
      %p49 = scmp.ne.s32.totalorder %s37, %s38
      %p50 = scmp.eq.s32.totalorder %s21, 1
      %p51 = por %p49, %p50
      %p53 = scmp.ne.s32.totalorder %s38, %s52
      %p54 = scmp.eq.s32.totalorder %s21, 0
      %p55 = por %p53, %p54
      %s57 = sadd.s32 %s56, 1
      %p60 = scmp.eq.s32.totalorder %s15, 1
      %p61 = scmp.ne.s32.totalorder %s56, %s58
      %p62 = scmp.eq.s32.totalorder %s15, 0
      %p63 = por %p61, %p62
      %p64 = scmp.ne.s32.totalorder %s56, %s58
      %p65 = scmp.eq.s32.totalorder %s20, 1
      %p66 = por %p64, %p65
      %p67 = scmp.ne.s32.totalorder %s58, %s59
      %p68 = scmp.eq.s32.totalorder %s20, 0
      %p69 = por %p67, %p68
      %p70 = scmp.ne.s32.totalorder %s58, %s59
      %p71 = scmp.eq.s32.totalorder %s21, 1
      %p72 = por %p70, %p71
      %p74 = scmp.ne.s32.totalorder %s59, %s73
      %p75 = scmp.eq.s32.totalorder %s21, 0
      %p76 = por %p74, %p75
      %s77 = ssub.s32 %s22, %s34
      %s78 = ssub.s32 %s23, %s30
      %s79 = sor.u32 %s77, %s78
      %p80 = scmp.eq.s32.totalorder %s79, 0
      %s82 = sadd.s32 %s81, 1
      %s83 = scalar_select %p80, %s81, %s82
      %p86 = pneg %p80
      %p87 = scmp.eq.s32.totalorder %s15, 1
      %p88 = por %p86, %p87
      %p89 = scmp.ne.s32.totalorder %s81, %s84
      %p90 = scmp.eq.s32.totalorder %s15, 0
      %p91 = por %p89, %p90
      %p92 = scmp.ne.s32.totalorder %s81, %s84
      %p93 = scmp.eq.s32.totalorder %s20, 1
      %p94 = por %p92, %p93
      %p95 = scmp.ne.s32.totalorder %s84, %s85
      %p96 = scmp.eq.s32.totalorder %s20, 0
      %p97 = por %p95, %p96
      %p98 = scmp.ne.s32.totalorder %s84, %s85
      %p99 = scmp.eq.s32.totalorder %s21, 1
      %p100 = por %p98, %p99
      %p102 = scmp.ne.s32.totalorder %s85, %s101
      %p103 = scmp.eq.s32.totalorder %s21, 0
      %p104 = por %p102, %p103
      %s105 = ssub.s32 %s22, %s34
      %s106 = ssub.s32 %s23, %s30
      %s107 = sor.u32 %s105, %s106
      %p108 = scmp.eq.s32.totalorder %s107, 0
      %s110 = sadd.s32 %s109, 1
      %s111 = scalar_select %p108, %s109, %s110
      %p114 = pneg %p108
      %p115 = scmp.eq.s32.totalorder %s15, 1
      %p116 = por %p114, %p115
      %p117 = scmp.ne.s32.totalorder %s109, %s112
      %p118 = scmp.eq.s32.totalorder %s15, 0
      %p119 = por %p117, %p118
      %p120 = scmp.ne.s32.totalorder %s109, %s112
      %p121 = scmp.eq.s32.totalorder %s20, 1
      %p122 = por %p120, %p121
      %p123 = scmp.ne.s32.totalorder %s112, %s113
      %p124 = scmp.eq.s32.totalorder %s20, 0
      %p125 = por %p123, %p124
      %p126 = scmp.ne.s32.totalorder %s112, %s113
      %p127 = scmp.eq.s32.totalorder %s21, 1
      %p128 = por %p126, %p127
      %p130 = scmp.ne.s32.totalorder %s113, %s129
      %p131 = scmp.eq.s32.totalorder %s21, 0
      %p132 = por %p130, %p131
      %p133 = scmp.le.s32.totalorder 1, %s15
      %p134 = scmp.lt.s32.totalorder %s15, 3
      %p135 = pnand %p133, %p134
      %p136 = pneg %p135
      // Predicated region
      $region9: #{tpu_custom_call.1} parent=5 // pred_check
        _
      $region10: #{tpu_custom_call.1} parent=5 // pred_check_branch
        %138 = sbr.rel (%p135) target = $region12
      $region11: #{tpu_custom_call.1} parent=5 // pred_region
        %s139 = ssub.s32 %s15, 1
        // Predicated region
        $region13: #{tpu_custom_call.1} parent=11 // pred_check
          %p140 = pneg %p48
        $region14: #{tpu_custom_call.1} parent=11 // pred_check_branch
          %142 = sbr.rel (%p140) target = $region16
        $region15: #{tpu_custom_call.1} parent=11 // pred_region
          _
        $region16: #{tpu_custom_call.1} parent=11 // pred_fallthru
          _
        // Predicated region
        $region17: #{tpu_custom_call.1} parent=11 // pred_check
          %p143 = pneg %p69
        $region18: #{tpu_custom_call.1} parent=11 // pred_check_branch
          %145 = sbr.rel (%p143) target = $region20
        $region19: #{tpu_custom_call.1} parent=11 // pred_region
          _
        $region20: #{tpu_custom_call.1} parent=11 // pred_fallthru
          _
      $region12: #{tpu_custom_call.1} parent=5 // pred_fallthru
        _
      %p146 = scmp.lt.s32.totalorder %s15, 2
      // Predicated region
      $region21: #{tpu_custom_call.1} parent=5 // pred_check
        %p147 = pneg %p146
      $region22: #{tpu_custom_call.1} parent=5 // pred_check_branch
        %149 = sbr.rel (%p147) target = $region24
      $region23: #{tpu_custom_call.1} parent=5 // pred_region
        // Predicated region
        $region25: #{tpu_custom_call.1} parent=23 // pred_check
          %p150 = pneg %p91
        $region26: #{tpu_custom_call.1} parent=23 // pred_check_branch
          %152 = sbr.rel (%p150) target = $region28
        $region27: #{tpu_custom_call.1} parent=23 // pred_region
          %s153 = sand.u32 %s81, 1
          %s154 = scalar_lea.sflag [#allocation3], %s153
          %s155 = sand.u32 %s81, 1
          %s156 = smul.addr %s155, 144
          %s157 = scalar_lea.vmem [#allocation2], %s156
          %s158 = smul.u32 2, %s23
          %s160 = ssub.s32 2304, 2304
          %161 = vsyncadd %s154, %s160
          %s162 = smul.addr %s22, 18
          %s163 = sadd.s32 %s158, %s162
          %s164 = smul.addr %s163, 128
          %s165 = scalar_lea.hbm %s2, %s164
          %s166 = sshll.u32 %s157, 4
          %s167 = int_to_ptr.vmem [resolvable:$true] %s166
          %172 = dma.hbm_to_vmem [thread:$0]  %s165, 2304, %s167, %s154, 256, 256, 16
        $region28: #{tpu_custom_call.1} parent=23 // pred_fallthru
          _
      $region24: #{tpu_custom_call.1} parent=5 // pred_fallthru
        _
      %p173 = scmp.le.s32.totalorder 1, %s15
      %p174 = scmp.lt.s32.totalorder %s15, 3
      %p175 = pnand %p173, %p174
      %p176 = pneg %p175
      // Predicated region
      $region29: #{tpu_custom_call.1} parent=5 // pred_check
        _
      $region30: #{tpu_custom_call.1} parent=5 // pred_check_branch
        %178 = sbr.rel (%p175) target = $region32
      $region31: #{tpu_custom_call.1} parent=5 // pred_region
        %s179 = ssub.s32 %s15, 1
        %s180 = sand.u32 %s84, 1
        %s181 = scalar_lea.sflag [#allocation3], %s180
        %s182 = sand.u32 %s84, 1
        %s183 = smul.addr %s182, 144
        %s184 = scalar_lea.vmem [#allocation2], %s183
        // Predicated region
        $region33: #{tpu_custom_call.1} parent=31 // pred_check
          %p185 = pneg %p97
        $region34: #{tpu_custom_call.1} parent=31 // pred_check_branch
          %187 = sbr.rel (%p185) target = $region36
        $region35: #{tpu_custom_call.1} parent=31 // pred_region
          %188 = dma.done %s181, 2304
        $region36: #{tpu_custom_call.1} parent=31 // pred_fallthru
          _
        %p189 = pneg %p48
        %p190 = pneg %p45
        %p191 = pneg %p69
        %p192 = pneg %p66
        %s193 = sand.u32 %s84, 1
        %s194 = scalar_lea.sflag [#allocation3], %s193
        %s195 = sand.u32 %s84, 1
        %s196 = smul.addr %s195, 144
        %s197 = scalar_lea.vmem [#allocation2], %s196
        %p198 = pneg %p97
        %p199 = pneg %p94
        %p200 = pneg %p125
        %p201 = pneg %p122
        %s202 = sand.u32 %s112, 1
        %s203 = scalar_lea.sflag [#allocation4], %s202
        %s204 = sand.u32 %s112, 1
        %s205 = smul.addr %s204, 32
        %s206 = scalar_lea.vmem [#allocation5], %s205
        %s207 = smul.u32 2, %s25
        %s208 = smul.u32 2, %s25
        %v209 = vld [vmem:[%s0] sm:$0xff]
        %v210 = vld [vmem:[%s0 + $0x8] sm:$0xff]
        %v211 = vld [vmem:[%s184] sm:$0xff]
        %v212 = vld [vmem:[%s184 + $0x8] sm:$0xff]
        %v213 = vld [vmem:[%s184 + $0x10] sm:$0xff]
        %v214 = vld [vmem:[%s184 + $0x18] sm:$0xff]
        %v215 = vld [vmem:[%s184 + $0x20] sm:$0xff]
        %v216 = vld [vmem:[%s184 + $0x28] sm:$0xff]
        %v217 = vld [vmem:[%s184 + $0x30] sm:$0xff]
        %v218 = vld [vmem:[%s184 + $0x38] sm:$0xff]
        %v219 = vld [vmem:[%s184 + $0x40] sm:$0xff]
        %v220 = vld [vmem:[%s184 + $0x48] sm:$0xff]
        %v221 = vld [vmem:[%s184 + $0x50] sm:$0xff]
        %v222 = vld [vmem:[%s184 + $0x58] sm:$0xff]
        %v223 = vld [vmem:[%s184 + $0x60] sm:$0xff]
        %v224 = vld [vmem:[%s184 + $0x68] sm:$0xff]
        %v225 = vld [vmem:[%s184 + $0x70] sm:$0xff]
        %v226 = vld [vmem:[%s184 + $0x78] sm:$0xff]
        %v227 = vld [vmem:[%s184 + $0x80] sm:$0xff]
        %v228 = vld [vmem:[%s184 + $0x88] sm:$0xff]
        %v229 = vld [vmem:[%s1] sm:$0xff]
        %v230 = vld [vmem:[%s1 + $0x8] sm:$0xff]
        %232 = vset.pattern.permute.xlu0 0
        %233 = vperm.xlu0 %232, %v229
        %v234 = vpop.permute.xlu0 %233
        %237 = vset.pattern.permute.xlu0 0
        %238 = vperm.xlu0 %237, %v230
        %v239 = vpop.permute.xlu0 %238
        %vm241 = vcmask 588800
        %v243 = vsel %vm241, %v209, 0
        %v246 = vsel %vm241, %v210, 0
        %248 = vmatprep.subr.mxu0 %v212
        %249 = vmatpush1.msra.mxu0 %v211
        %250 = vmatprep.subr.mxu0 %v214
        %251 = vmatpush1.msra.mxu0 %v213
        %252 = vmatprep.subr.mxu0 %v216
        %253 = vmatpush1.msra.mxu0 %v215
        %254 = vmatprep.subr.mxu0 %v218
        %255 = vmatpush1.msra.mxu0 %v217
        %256 = vmatprep.subr.mxu0 %v220
        %257 = vmatpush1.msra.mxu0 %v219
        %258 = vmatprep.subr.mxu0 %v222
        %259 = vmatpush1.msra.mxu0 %v221
        %260 = vmatprep.subr.mxu0 %v224
        %261 = vmatpush1.msra.mxu0 %v223
        %262 = vmatprep.subr.mxu0 %v226
        %263 = vmatpush1.msra.mxu0 %v225
        %264 = vmatprep.subr.mxu0 %v228
        %265 = vmatpush1.msra.mxu0 %v227
        %266 = vmatprep.subr.mxu0 0.0
        %267 = vmatpush1.msra.mxu0 0.0
        %268 = vmatprep.subr.mxu0 0.0
        %269 = vmatpush1.msra.mxu0 0.0
        %270 = vmatprep.subr.mxu0 0.0
        %271 = vmatpush1.msra.mxu0 0.0
        %272 = vmatprep.subr.mxu0 0.0
        %273 = vmatpush1.msra.mxu0 0.0
        %274 = vmatprep.subr.mxu0 0.0
        %275 = vmatpush1.msra.mxu0 0.0
        %276 = vmatprep.subr.mxu0 0.0
        %277 = vmatpush1.msra.mxu0 0.0
        %278 = vmatprep.subr.mxu0 0.0
        %279 = vmatpush1.msra.mxu0 0.0
        %280 = vmatprep.subr.mxu0 0.0
        %281 = vmatpush1.msra.mxu0 0.0
        %282 = vmatprep.subr.mxu0 0.0
        %283 = vmatpush1.msra.mxu0 0.0
        %284 = vmatprep.subr.mxu0 0.0
        %285 = vmatpush1.msra.mxu0 0.0
        %286 = vmatprep.subr.mxu0 0.0
        %287 = vmatpush1.msra.mxu0 0.0
        %288 = vmatprep.subr.mxu0 0.0
        %289 = vmatpush1.msra.mxu0 0.0
        %290 = vmatprep.subr.mxu0 0.0
        %291 = vmatpush1.msra.mxu0 0.0
        %292 = vmatprep.subr.mxu0 0.0
        %293 = vmatpush1.msra.mxu0 0.0
        %294 = vmatprep.subr.mxu0 0.0
        %295 = vmatpush1.msra.mxu0 0.0
        %296 = vmatprep.subr.mxu0 0.0
        %297 = vmatpush1.msra.mxu0 0.0
        %298 = vmatprep.subr.mxu0 0.0
        %299 = vmatpush1.msra.mxu0 0.0
        %300 = vmatprep.subr.mxu0 0.0
        %301 = vmatpush1.msra.mxu0 0.0
        %302 = vmatprep.subr.mxu0 0.0
        %303 = vmatpush1.msra.mxu0 0.0
        %304 = vmatprep.subr.mxu0 0.0
        %305 = vmatpush1.msra.mxu0 0.0
        %306 = vmatprep.subr.mxu0 0.0
        %307 = vmatpush1.msra.mxu0 0.0
        %308 = vmatprep.subr.mxu0 0.0
        %309 = vmatpush1.msra.mxu0 0.0
        %310 = vmatprep.subr.mxu0 0.0
        %311 = vmatpush1.msra.mxu0 0.0
        %312 = vmatprep.mubr.f32.mxu0 0.0
        %313 = vmatmul.mubr.f32.gmra.mrb[0].mxu0 %v243
        %v314 = vpop.f32.mrb[0].mxu0
        %v315 = vadd.f32 %v234, %v314
        %v316 = vpop.f32.mrb[0].mxu0
        %v317 = vadd.f32 %v234, %v316
        %318 = vmatprep.mubr.f32.mxu0 0.0
        %319 = vmatmul.mubr.f32.gmra.mrb[0].mxu0 %v246
        %v320 = vpop.f32.mrb[0].mxu0
        %v321 = vadd.f32 %v239, %v320
        %v322 = vpop.f32.mrb[0].mxu0
        %v323 = vadd.f32 %v239, %v322
        %324 = vdwg.mxu0
        %325 = vst [vmem:[%s206] sm:$0xff] %v315
        %326 = vst [vmem:[%s206 + $0x8] sm:$0xff] %v317
        %327 = vst [vmem:[%s206 + $0x10] sm:$0xff] %v321
        %328 = vst [vmem:[%s206 + $0x18] sm:$0xff] %v323
        %s329 = sand.u32 %s112, 1
        %s330 = scalar_lea.sflag [#allocation4], %s329
        %s331 = sand.u32 %s112, 1
        %s332 = smul.addr %s331, 32
        %s333 = scalar_lea.vmem [#allocation5], %s332
        // Predicated region
        $region37: #{tpu_custom_call.1} parent=31 // pred_check
          %p334 = pneg %p122
        $region38: #{tpu_custom_call.1} parent=31 // pred_check_branch
          %336 = sbr.rel (%p334) target = $region40
        $region39: #{tpu_custom_call.1} parent=31 // pred_region
          %s337 = smul.u32 2, %s25
          %s339 = ssub.s32 512, 512
          %340 = vsyncadd %s330, %s339
          %s341 = smul.addr %s24, 4
          %s342 = sadd.s32 %s337, %s341
          %s343 = smul.addr %s342, 128
          %s344 = scalar_lea.hbm %s3, %s343
          %s345 = sshll.u32 %s333, 4
          %s346 = int_to_ptr.vmem [resolvable:$true] %s345
          %351 = dma.vmem_to_hbm [thread:$0]  %s346, 512, %s344, %s330, 256, 256, 16
        $region40: #{tpu_custom_call.1} parent=31 // pred_fallthru
          _
      $region32: #{tpu_custom_call.1} parent=5 // pred_fallthru
        _
      %p352 = scmp.le.s32.totalorder 2, %s15
      // Predicated region
      $region41: #{tpu_custom_call.1} parent=5 // pred_check
        %p353 = pneg %p352
      $region42: #{tpu_custom_call.1} parent=5 // pred_check_branch
        %355 = sbr.rel (%p353) target = $region44
      $region43: #{tpu_custom_call.1} parent=5 // pred_region
        %s356 = ssub.s32 %s15, 2
        // Predicated region
        $region45: #{tpu_custom_call.1} parent=43 // pred_check
          %p357 = pneg %p128
        $region46: #{tpu_custom_call.1} parent=43 // pred_check_branch
          %359 = sbr.rel (%p357) target = $region48
        $region47: #{tpu_custom_call.1} parent=43 // pred_region
          %s360 = sand.u32 %s113, 1
          %s361 = scalar_lea.sflag [#allocation4], %s360
          %s362 = sand.u32 %s113, 1
          %s363 = smul.addr %s362, 32
          %s364 = scalar_lea.vmem [#allocation5], %s363
          %365 = dma.done %s361, 512
        $region48: #{tpu_custom_call.1} parent=43 // pred_fallthru
          _
      $region44: #{tpu_custom_call.1} parent=5 // pred_fallthru
        _
    $region6: #{tpu_custom_call.1} parent=1 // loop_footer
      %s19 = sadd.s32 1, %s15
    $region7: #{tpu_custom_call.1} parent=1 // loop_footer_branch
      %14 = sbr.rel target = $region3
    $region8: #{tpu_custom_call.1} parent=1 // loop_exit
      _
    %366 = vsyncpa [#allocation3], 1
    %s367 = scalar_lea.sflag [#allocation3], 1
    %368 = vsyncpa %s367, 1
    %369 = vsyncpa [#allocation4], 1
    %s370 = scalar_lea.sflag [#allocation4], 1
    %371 = vsyncpa %s370, 1

</llo_original>
